<compile_context>
chip_gen: v5e
topology: v5e:2x2
jax: 0.10.0
libtpu: 0.0.40
codegen_flags: <defaults>
</compile_context>

<pallas_src>
import functools

import jax
import jax.numpy as jnp
from jax.experimental import pallas as pl
from jax.experimental.pallas import tpu as pltpu


def _round_up(n, m):
    return ((n + m - 1) // m) * m


def _physical_vmem_bytes():
    """Per-core VMEM capacity; conservative fallback is v7x's 64 MiB."""
    try:
        info = pltpu.get_tpu_info()
        v = getattr(info, "vmem_capacity_bytes", None)
        if v:
            return int(v)
    except Exception:
        pass
    return 64 * 1024 * 1024


def _resident_need_bytes(tm, d_model, d_ffn, x_bytes, w_bytes):
    # x / out tiles (double-buffered) + W1/W2/biases (conservatively doubled)
    # + f32 live intermediates.
    io = 2 * (tm * d_model) * x_bytes * 2
    wts = 2 * ((d_model * d_ffn + d_ffn * d_model) * w_bytes + (d_ffn + d_model) * 4)
    live = tm * d_ffn * 4 + tm * d_model * 4
    return io + wts + live


def _kstream_need_bytes(tm, tk, d_model, d_ffn, x_bytes, w_bytes):
    io = 2 * (tm * d_model) * x_bytes * 2
    wts = 2 * (d_model * tk + tk * d_model) * w_bytes + 2 * (d_ffn + d_model) * 4
    acc = tm * d_model * 4
    live = tm * tk * 4
    return io + wts + acc + live


def ffn_kernel_resident(x_ref, w1_ref, b1_ref, w2_ref, b2_ref, o_ref):
    # x_ref: (tm, d_model); w1_ref: (d_model, d_ffn); b1_ref: (1, d_ffn)
    # w2_ref: (d_ffn, d_model); b2_ref: (1, d_model); o_ref: (tm, d_model)
    h = jnp.dot(x_ref[...], w1_ref[...], preferred_element_type=jnp.float32)
    h = jnp.maximum(h + b1_ref[...], 0.0)
    y = jnp.dot(h.astype(w2_ref.dtype), w2_ref[...],
                preferred_element_type=jnp.float32)
    o_ref[...] = (y + b2_ref[...]).astype(o_ref.dtype)


def ffn_kernel_kstream(x_ref, w1_ref, b1_ref, w2_ref, b2_ref, o_ref, acc_ref):
    # x_ref: (tm, d_model); w1_ref: (d_model, tk); b1_ref: (n_k, tk) full block
    # w2_ref: (tk, d_model); b2_ref: (1, d_model); o_ref: (tm, d_model)
    # acc_ref: (tm, d_model) f32 scratch accumulator (lives across k steps)
    k = pl.program_id(1)

    @pl.when(k == 0)
    def _():
        acc_ref[...] = jnp.zeros_like(acc_ref)

    h = jnp.dot(x_ref[...], w1_ref[...], preferred_element_type=jnp.float32)
    # b1 is resident as a full (n_k, tk) block; pick this K step's row.
    h = jnp.maximum(h + b1_ref[pl.ds(k, 1), :], 0.0)

    acc_ref[...] += jnp.dot(h.astype(w2_ref.dtype), w2_ref[...],
                            preferred_element_type=jnp.float32)

    @pl.when(k == pl.num_programs(1) - 1)
    def _():
        o_ref[...] = (acc_ref[...] + b2_ref[...]).astype(o_ref.dtype)


def positionwise_ffn(x, w1, b1, w2, b2, *, tm=512, tk=1024):
    """x: (batch, seq, d_model); w1: (d_model, d_ffn); w2: (d_ffn, d_model).

    Weights are stored pre-transposed as (in_features, out_features).
    For peak MXU throughput feed bf16 x/w1/w2 (accumulation stays f32); keep
    d_model a multiple of 128 and tm large (>=256 on all generations).
    """
    B, S, d_model = x.shape
    d_ffn = w1.shape[1]
    M = B * S

    x_bytes = jnp.dtype(x.dtype).itemsize
    w_bytes = jnp.dtype(w1.dtype).itemsize

    physical = _physical_vmem_bytes()
    budget = (physical * 3) // 4  # ~96 MiB on v5e/v6e (128 MiB), ~48 MiB on v7x

    # Row-tile candidates (largest first).  Large tm keeps arithmetic intensity
    # high in the K-streaming regime; for tiny / ragged inputs clamp to the
    # padded row count to avoid computing mostly-garbage rows.
    row_cap = _round_up(M, 8)
    tm_cands = []
    for t in (tm, 1024, 512, 256, 128):
        t = _round_up(max(8, min(t, row_cap)), 8)
        if t not in tm_cands:
            tm_cands.append(t)
    tm_cands.sort(reverse=True)

    # d_ffn reduction-tile candidates: 128-aligned divisors of d_ffn.
    tk_cands = []
    for t in (tk, 4096, 2048, 1024, 512, 256, 128):
        if 0 < t <= d_ffn and d_ffn % t == 0 and t % 128 == 0 and t not in tk_cands:
            tk_cands.append(t)
    tk_cands.sort(reverse=True)

    plan = None
    # 1) Resident weights: W1/W2 are DMA'd exactly once for the whole kernel.
    for t in tm_cands:
        if _resident_need_bytes(t, d_model, d_ffn, x_bytes, w_bytes) <= budget:
            plan = ("resident", t, d_ffn)
            break
    # 2) Otherwise stream d_ffn in K blocks; keep tm as large as possible and
    #    shrink tk first (weight re-streaming is the binding resource).
    if plan is None:
        for t in tm_cands:
            for tkk in tk_cands:
                if _kstream_need_bytes(t, tkk, d_model, d_ffn,
                                       x_bytes, w_bytes) <= budget:
                    plan = ("kstream", t, tkk)
                    break
            if plan is not None:
                break
    if plan is None:
        # Last resort for exotic shapes: smallest tiles, let the compiler cope.
        plan = (("kstream", tm_cands[-1], tk_cands[-1]) if tk_cands
                else ("resident", tm_cands[-1], d_ffn))

    mode, tm, tk = plan
    M_pad = _round_up(M, tm)

    x2d = x.reshape(M, d_model)
    if M_pad != M:
        x2d = jnp.pad(x2d, ((0, M_pad - M), (0, 0)))
    b2_2d = b2.reshape(1, d_model)

    vmem_limit = int(budget)

    if mode == "resident":
        b1_2d = b1.reshape(1, d_ffn)
        out2d = pl.pallas_call(
            ffn_kernel_resident,
            out_shape=jax.ShapeDtypeStruct((M_pad, d_model), x.dtype),
            grid_spec=pltpu.PrefetchScalarGridSpec(
                num_scalar_prefetch=0,
                grid=(M_pad // tm,),
                in_specs=[
                    pl.BlockSpec((tm, d_model), lambda i: (i, 0)),     # x rows
                    pl.BlockSpec((d_model, d_ffn), lambda i: (0, 0)),  # W1 (once)
                    pl.BlockSpec((1, d_ffn), lambda i: (0, 0)),        # b1 (once)
                    pl.BlockSpec((d_ffn, d_model), lambda i: (0, 0)),  # W2 (once)
                    pl.BlockSpec((1, d_model), lambda i: (0, 0)),      # b2 (once)
                ],
                out_specs=pl.BlockSpec((tm, d_model), lambda i: (i, 0)),
            ),
            compiler_params=pltpu.CompilerParams(
                dimension_semantics=("parallel",),
                vmem_limit_bytes=vmem_limit,
            ),
        )(x2d, w1, b1_2d, w2, b2_2d)
    else:
        n_k = d_ffn // tk
        b1_ks = b1.reshape(n_k, tk)  # full-resident bias, row k picked in-kernel
        out2d = pl.pallas_call(
            ffn_kernel_kstream,
            out_shape=jax.ShapeDtypeStruct((M_pad, d_model), x.dtype),
            grid_spec=pltpu.PrefetchScalarGridSpec(
                num_scalar_prefetch=0,
                grid=(M_pad // tm, n_k),
                in_specs=[
                    pl.BlockSpec((tm, d_model), lambda i, k: (i, 0)),   # x rows
                    pl.BlockSpec((d_model, tk), lambda i, k: (0, k)),   # W1 K-block
                    pl.BlockSpec((n_k, tk), lambda i, k: (0, 0)),       # b1 (once)
                    pl.BlockSpec((tk, d_model), lambda i, k: (k, 0)),   # W2 K-block
                    pl.BlockSpec((1, d_model), lambda i, k: (0, 0)),    # b2 (once)
                ],
                out_specs=pl.BlockSpec((tm, d_model), lambda i, k: (i, 0)),
                scratch_shapes=[pltpu.VMEM((tm, d_model), jnp.float32)],
            ),
            compiler_params=pltpu.CompilerParams(
                dimension_semantics=("parallel", "arbitrary"),
                vmem_limit_bytes=vmem_limit,
            ),
        )(x2d, w1, b1_ks, w2, b2_2d)

    return out2d[:M].reshape(B, S, d_model)


if __name__ == "__main__":
    # Small, module-consistent demo shapes: batch=2, seq=8, d_model=32, d_ffn=64.
    # (Real deployments: use bf16 weights and lane-dense dims, d_model>=128.)
    B, S, d_model, d_ffn = 2, 8, 32, 64

    key = jax.random.PRNGKey(0)
    kx, kw1, kb1, kw2, kb2 = jax.random.split(key, 5)

    x = jax.random.normal(kx, (B, S, d_model), dtype=jnp.float32)

    # Deterministic parameter init (PyTorch nn.Linear-style uniform bounds),
    # stored pre-transposed as (in_features, out_features).
    lim1 = 1.0 / (d_model ** 0.5)
    lim2 = 1.0 / (d_ffn ** 0.5)
    w1 = jax.random.uniform(kw1, (d_model, d_ffn), jnp.float32, -lim1, lim1)
    b1 = jax.random.uniform(kb1, (d_ffn,), jnp.float32, -lim1, lim1)
    w2 = jax.random.uniform(kw2, (d_ffn, d_model), jnp.float32, -lim2, lim2)
    b2 = jax.random.uniform(kb2, (d_model,), jnp.float32, -lim2, lim2)

    out = positionwise_ffn(x, w1, b1, w2, b2)
    jax.block_until_ready(out)

    # Reference check in plain JAX (dropout is identity in eval mode).
    ref = jnp.maximum(x @ w1 + b1, 0.0) @ w2 + b2
    assert out.shape == (B, S, d_model)
    assert jnp.allclose(out, ref, atol=1e-4, rtol=1e-4), "mismatch vs reference"

    print("KERNEL_OK")
</pallas_src>

<mosaic_0001>
module attributes {stable_mosaic.version = 11 : i64} {
  func.func @ffn_kernel_resident(%arg0: i32, %arg1: memref<16x32xf32, #tpu.memory_space<vmem>>, %arg2: memref<32x64xf32, #tpu.memory_space<vmem>>, %arg3: memref<1x64xf32, #tpu.memory_space<vmem>>, %arg4: memref<64x32xf32, #tpu.memory_space<vmem>>, %arg5: memref<1x32xf32, #tpu.memory_space<vmem>>, %arg6: memref<16x32xf32, #tpu.memory_space<vmem>>) attributes {dimension_semantics = [#tpu.dimension_semantics<parallel>], iteration_bounds = array<i64: 1>, scalar_prefetch = 0 : i64, scratch_operands = 0 : i64, tpu.core_type = #tpu.core_type<tc>, window_params = [{transform_indices = @transform_0, window_bounds = array<i64: 16, 32>}, {pipeline_mode = #tpu.pipeline_mode<synchronous>, transform_indices = @transform_1, window_bounds = array<i64: 32, 64>}, {pipeline_mode = #tpu.pipeline_mode<synchronous>, transform_indices = @transform_2, window_bounds = array<i64: 1, 64>}, {pipeline_mode = #tpu.pipeline_mode<synchronous>, transform_indices = @transform_3, window_bounds = array<i64: 64, 32>}, {pipeline_mode = #tpu.pipeline_mode<synchronous>, transform_indices = @transform_4, window_bounds = array<i64: 1, 32>}, {transform_indices = @transform_5, window_bounds = array<i64: 16, 32>}]} {
    %c0 = arith.constant 0 : index
    %c0_0 = arith.constant 0 : index
    %0 = vector.load %arg1[%c0, %c0_0] : memref<16x32xf32, #tpu.memory_space<vmem>>, vector<16x32xf32>
    %c0_1 = arith.constant 0 : index
    %c0_2 = arith.constant 0 : index
    %1 = vector.load %arg2[%c0_1, %c0_2] : memref<32x64xf32, #tpu.memory_space<vmem>>, vector<32x64xf32>
    %cst = arith.constant dense<0.000000e+00> : vector<16x64xf32>
    %2 = tpu.matmul %0, %1, %cst {dimension_numbers = #tpu.dot_dimension_numbers<[1], [0], [0], [1], [0, 0, 1, 1], [], []>} : vector<16x32xf32>, vector<32x64xf32>, vector<16x64xf32> -> vector<16x64xf32>
    %c0_3 = arith.constant 0 : index
    %c0_4 = arith.constant 0 : index
    %3 = vector.load %arg3[%c0_3, %c0_4] : memref<1x64xf32, #tpu.memory_space<vmem>>, vector<1x64xf32>
    %4 = vector.broadcast %3 : vector<1x64xf32> to vector<16x64xf32>
    %5 = arith.addf %2, %4 : vector<16x64xf32>
    %cst_5 = arith.constant 0.000000e+00 : f32
    %6 = vector.broadcast %cst_5 : f32 to vector<16x64xf32>
    %7 = arith.maximumf %5, %6 : vector<16x64xf32>
    %c0_6 = arith.constant 0 : index
    %c0_7 = arith.constant 0 : index
    %8 = vector.load %arg4[%c0_6, %c0_7] : memref<64x32xf32, #tpu.memory_space<vmem>>, vector<64x32xf32>
    %cst_8 = arith.constant dense<0.000000e+00> : vector<16x32xf32>
    %9 = tpu.matmul %7, %8, %cst_8 {dimension_numbers = #tpu.dot_dimension_numbers<[1], [0], [0], [1], [0, 0, 1, 1], [], []>} : vector<16x64xf32>, vector<64x32xf32>, vector<16x32xf32> -> vector<16x32xf32>
    %c0_9 = arith.constant 0 : index
    %c0_10 = arith.constant 0 : index
    %10 = vector.load %arg5[%c0_9, %c0_10] : memref<1x32xf32, #tpu.memory_space<vmem>>, vector<1x32xf32>
    %11 = vector.broadcast %10 : vector<1x32xf32> to vector<16x32xf32>
    %12 = arith.addf %9, %11 : vector<16x32xf32>
    %c0_11 = arith.constant 0 : index
    %c0_12 = arith.constant 0 : index
    %13 = vector.load %arg6[%c0_11, %c0_12] : memref<16x32xf32, #tpu.memory_space<vmem>>, vector<16x32xf32>
    tpu.vector_store %arg6[%c0_11, %c0_12], %12 {strides = array<i32>} : memref<16x32xf32, #tpu.memory_space<vmem>>, vector<16x32xf32>,
    return
  }
  func.func @transform_0(%arg0: i32) -> (i32, i32) {
    %c0_i32 = arith.constant 0 : i32
    %c0_i32_0 = arith.constant 0 : i32
    return %arg0, %c0_i32 : i32, i32
  }
  func.func @transform_1(%arg0: i32) -> (i32, i32) {
    %c0_i32 = arith.constant 0 : i32
    %c0_i32_0 = arith.constant 0 : i32
    %c0_i32_1 = arith.constant 0 : i32
    return %c0_i32, %c0_i32_0 : i32, i32
  }
  func.func @transform_2(%arg0: i32) -> (i32, i32) {
    %c0_i32 = arith.constant 0 : i32
    %c0_i32_0 = arith.constant 0 : i32
    %c0_i32_1 = arith.constant 0 : i32
    return %c0_i32, %c0_i32_0 : i32, i32
  }
  func.func @transform_3(%arg0: i32) -> (i32, i32) {
    %c0_i32 = arith.constant 0 : i32
    %c0_i32_0 = arith.constant 0 : i32
    %c0_i32_1 = arith.constant 0 : i32
    return %c0_i32, %c0_i32_0 : i32, i32
  }
  func.func @transform_4(%arg0: i32) -> (i32, i32) {
    %c0_i32 = arith.constant 0 : i32
    %c0_i32_0 = arith.constant 0 : i32
    %c0_i32_1 = arith.constant 0 : i32
    return %c0_i32, %c0_i32_0 : i32, i32
  }
  func.func @transform_5(%arg0: i32) -> (i32, i32) {
    %c0_i32 = arith.constant 0 : i32
    %c0_i32_0 = arith.constant 0 : i32
    return %arg0, %c0_i32 : i32, i32
  }
}

</mosaic_0001>

<llo_original>
// kernel: tpu_custom_call.1
$region0: #{tpu_custom_call.1}
  #allocation0 [shape = 'u32[]', space=smem, size = 0x4, offset = 0x4, fixed_abs, tag = 'smem constant byte address 0x4 - core index']
  #allocation1 [shape = 'u32[72,128]{1,0:T(1,128)}', space=vmem, size = 0x9000, scoped, tag = 'internal scratch']
  %s0 = inlined_call_operand.vmem [shape: f32[16,32], index: 0, kind: input, shape index: {}]
  %s1 = inlined_call_operand.vmem [shape: f32[32,64], index: 1, kind: input, shape index: {}]
  %s2 = inlined_call_operand.vmem [shape: f32[1,64], index: 2, kind: input, shape index: {}]
  %s3 = inlined_call_operand.vmem [shape: f32[64,32], index: 3, kind: input, shape index: {}]
  %s4 = inlined_call_operand.vmem [shape: f32[1,32], index: 4, kind: input, shape index: {}]
  %s5 = inlined_call_operand.hbm [shape: f32[16,32], index: 5, kind: output, shape index: {}]
  %s6 = sld [smem:[#allocation0]]
  $region30: #{tpu_custom_call.1} parent=0
    _
  %s8 = ssub.s32 1, %s6
  %s9 = scalar_select 0, %s8, %s6
  $region1: #{tpu_custom_call.1} parent=0
    #allocation2 [shape = 'u8[8192]{0}', space=vmem, size = 0x2000, scoped, tag = 'output window, operand 0, single buffered']
    #allocation3 [shape = 's32[1]{0}', space=sflag, size = 0x4, scoped, tag = 'scoped memory for tpu_custom_call.1']
    %10 = vsyncpa [#allocation3], 0
    // Predicated region
    $region2: #{tpu_custom_call.1} parent=1 // pred_check
      _
    $region3: #{tpu_custom_call.1} parent=1 // pred_check_branch
      %12 = sbr.rel (0) target = $region5
    $region4: #{tpu_custom_call.1} parent=1 // pred_region
      _
    $region5: #{tpu_custom_call.1} parent=1 // pred_fallthru
      _
    // Predicated region
    $region6: #{tpu_custom_call.1} parent=1 // pred_check
      _
    $region7: #{tpu_custom_call.1} parent=1 // pred_check_branch
      %14 = sbr.rel (0) target = $region9
    $region8: #{tpu_custom_call.1} parent=1 // pred_region
      _
    $region9: #{tpu_custom_call.1} parent=1 // pred_fallthru
      _
    // Predicated region
    $region10: #{tpu_custom_call.1} parent=1 // pred_check
      _
    $region11: #{tpu_custom_call.1} parent=1 // pred_check_branch
      %16 = sbr.rel (0) target = $region13
    $region12: #{tpu_custom_call.1} parent=1 // pred_region
      _
    $region13: #{tpu_custom_call.1} parent=1 // pred_fallthru
      _
    // Predicated region
    $region14: #{tpu_custom_call.1} parent=1 // pred_check
      _
    $region15: #{tpu_custom_call.1} parent=1 // pred_check_branch
      %18 = sbr.rel (0) target = $region17
    $region16: #{tpu_custom_call.1} parent=1 // pred_region
      _
    $region17: #{tpu_custom_call.1} parent=1 // pred_fallthru
      _
    // Predicated region
    $region18: #{tpu_custom_call.1} parent=1 // pred_check
      _
    $region19: #{tpu_custom_call.1} parent=1 // pred_check_branch
      %20 = sbr.rel (0) target = $region21
    $region20: #{tpu_custom_call.1} parent=1 // pred_region
      _
    $region21: #{tpu_custom_call.1} parent=1 // pred_fallthru
      _
    %v21 = vld [vmem:[%s0] sm:$0xff]
    %v22 = vld [vmem:[%s0 + $0x8] sm:$0xff]
    %v23 = vld [vmem:[%s1] sm:$0xff]
    %v24 = vld [vmem:[%s1 + $0x8] sm:$0xff]
    %v25 = vld [vmem:[%s1 + $0x10] sm:$0xff]
    %v26 = vld [vmem:[%s1 + $0x18] sm:$0xff]
    %v27 = vld [vmem:[%s2] sm:$0x1]
    %v29 = vperm.slane %v27, 0
    %vm31 = vcmask 261120
    %v33 = vsel %vm31, %v21, 0
    %v36 = vsel %vm31, %v22, 0
    %38 = vmatpush.msra.mxu0 0.0
    %39 = vmatpush.msra.mxu0 0.0
    %40 = vmatpush.msra.mxu0 0.0
    %41 = vmatpush.msra.mxu0 0.0
    %42 = vmatpush.msra.mxu0 0.0
    %43 = vmatpush.msra.mxu0 0.0
    %44 = vmatpush.msra.mxu0 0.0
    %45 = vmatpush.msra.mxu0 0.0
    %46 = vmatpush.msra.mxu0 0.0
    %47 = vmatpush.msra.mxu0 0.0
    %48 = vmatpush.msra.mxu0 0.0
    %49 = vmatpush.msra.mxu0 0.0
    %50 = vmatpush.msra.mxu0 %v26
    %51 = vmatpush.msra.mxu0 %v25
    %52 = vmatpush.msra.mxu0 %v24
    %53 = vmatpush.msra.mxu0 %v23
    %54 = vmatmul.f32.gmra.mxu0 %v33
    %v55 = vpop.f32.mrf.mxu0
    %v56 = vadd.f32 %v29, %v55
    %57 = vmatmul.f32.gmra.mxu0 %v36
    %v58 = vpop.f32.mrf.mxu0
    %v59 = vadd.f32 %v29, %v58
    %60 = vdwg.mxu0
    %v61 = vmax.f32 %v56, 0.0
    %v62 = vmax.f32 %v59, 0.0
    %v63 = vld [vmem:[%s3] sm:$0xff]
    %v64 = vld [vmem:[%s3 + $0x8] sm:$0xff]
    %v65 = vld [vmem:[%s3 + $0x10] sm:$0xff]
    %v66 = vld [vmem:[%s3 + $0x18] sm:$0xff]
    %v67 = vld [vmem:[%s3 + $0x20] sm:$0xff]
    %v68 = vld [vmem:[%s3 + $0x28] sm:$0xff]
    %v69 = vld [vmem:[%s3 + $0x30] sm:$0xff]
    %v70 = vld [vmem:[%s3 + $0x38] sm:$0xff]
    %v71 = vld [vmem:[%s4] sm:$0x1]
    %v73 = vperm.slane %v71, 0
    %vm75 = vcmask 523264
    %v77 = vsel %vm75, %v61, 0
    %v80 = vsel %vm75, %v62, 0
    %82 = vmatpush.msra.mxu0 0.0
    %83 = vmatpush.msra.mxu0 0.0
    %84 = vmatpush.msra.mxu0 0.0
    %85 = vmatpush.msra.mxu0 0.0
    %86 = vmatpush.msra.mxu0 0.0
    %87 = vmatpush.msra.mxu0 0.0
    %88 = vmatpush.msra.mxu0 0.0
    %89 = vmatpush.msra.mxu0 0.0
    %90 = vmatpush.msra.mxu0 %v70
    %91 = vmatpush.msra.mxu0 %v69
    %92 = vmatpush.msra.mxu0 %v68
    %93 = vmatpush.msra.mxu0 %v67
    %94 = vmatpush.msra.mxu0 %v66
    %95 = vmatpush.msra.mxu0 %v65
    %96 = vmatpush.msra.mxu0 %v64
    %97 = vmatpush.msra.mxu0 %v63
    %98 = vmatmul.f32.gmra.mxu0 %v77
    %v99 = vpop.f32.mrf.mxu0
    %v100 = vadd.f32 %v73, %v99
    %101 = vmatmul.f32.gmra.mxu0 %v80
    %v102 = vpop.f32.mrf.mxu0
    %v103 = vadd.f32 %v73, %v102
    %104 = vdwg.mxu0
    %105 = vst.msk [vmem:[#allocation2] sm:$0xff] %vm31, %v100
    %106 = vst.msk [vmem:[#allocation2 + $0x8] sm:$0xff] %vm31, %v103
    // Predicated region
    $region22: #{tpu_custom_call.1} parent=1 // pred_check
      _
    $region23: #{tpu_custom_call.1} parent=1 // pred_check_branch
      %108 = sbr.rel (0) target = $region25
    $region24: #{tpu_custom_call.1} parent=1 // pred_region
      %110 = vsyncadd [#allocation3], 0
      %s111 = sshll.u32 [#allocation2], 4
      %s112 = int_to_ptr.vmem [resolvable:$true] %s111
      %s113 = sshll.u32 %s5, 4
      %s114 = int_to_ptr.hbm [resolvable:$true] %s113
      %119 = dma.vmem_to_hbm [thread:$0]  %s112, 256, %s114, [#allocation3], 128, 128, 8
    $region25: #{tpu_custom_call.1} parent=1 // pred_fallthru
      _
    // Predicated region
    $region26: #{tpu_custom_call.1} parent=1 // pred_check
      _
    $region27: #{tpu_custom_call.1} parent=1 // pred_check_branch
      %121 = sbr.rel (0) target = $region29
    $region28: #{tpu_custom_call.1} parent=1 // pred_region
      %123 = dma.done [#allocation3], 256
    $region29: #{tpu_custom_call.1} parent=1 // pred_fallthru
      _
    %124 = vsyncpa [#allocation3], 1

</llo_original>
